<compile_context>
chip_gen: v6e
topology: v6e:2x2x1
jax: 0.10.0
libtpu: 0.0.40
codegen_flags: <defaults>
</compile_context>

<pallas_src>
import jax
import jax.numpy as jnp
from jax.experimental import pallas as pl
from jax.experimental.pallas import tpu as pltpu


def _round_up(x, m):
    return ((x + m - 1) // m) * m


def parser_mlp_kernel(x_ref, w1_ref, b1_ref, w2_ref, b2_ref, w3_ref, b3_ref, o_ref):
    # layer 1: bf16 operands on the MXU, f32 accumulation; bias + cube in f32 (VPU)
    h1 = jnp.dot(x_ref[...], w1_ref[...], preferred_element_type=jnp.float32) + b1_ref[...]
    h1 = h1 * h1 * h1
    # TODO(synk): nn.Dropout is identity at inference; training-mode dropout
    #             (pltpu.prng_random_bits mask) is not implemented here.
    # layer 2 + ReLU
    h2 = jnp.dot(h1.astype(jnp.bfloat16), w2_ref[...], preferred_element_type=jnp.float32) + b2_ref[...]
    h2 = jnp.maximum(h2, 0.0)
    # output layer (num_classes zero-padded to a lane-dense multiple of 128)
    out = jnp.dot(h2.astype(jnp.bfloat16), w3_ref[...], preferred_element_type=jnp.float32) + b3_ref[...]
    o_ref[...] = out.astype(o_ref.dtype)  # bf16 writeback halves padded-store traffic


def prepare_inference_params(params):
    """One-time cast / pad of parameters for the fused inference kernel.

    - embedding tables -> bf16 (halves gather/concat glue bytes)
    - W1/W2/W3 -> bf16 MXU operands; biases stay f32
    - W3/b3 zero-padded to a lane-dense multiple of 128 output columns
    """
    num_classes = params["b3"].shape[-1]
    ncp = _round_up(num_classes, 128)
    w3 = params["w3"].astype(jnp.bfloat16)
    b3 = params["b3"].astype(jnp.float32)
    if ncp != num_classes:
        w3 = jnp.pad(w3, ((0, 0), (0, ncp - num_classes)))
        b3 = jnp.pad(b3, ((0, 0), (0, ncp - num_classes)))
    return {
        "word_emb": params["word_emb"].astype(jnp.bfloat16),
        "pos_emb": params["pos_emb"].astype(jnp.bfloat16),
        "dep_emb": params["dep_emb"].astype(jnp.bfloat16),
        "w1": params["w1"].astype(jnp.bfloat16),
        "b1": params["b1"].astype(jnp.float32),
        "w2": params["w2"].astype(jnp.bfloat16),
        "b2": params["b2"].astype(jnp.float32),
        "w3": w3,
        "b3": b3,
        "num_classes": num_classes,
    }


def _choose_batch_tile(B, batch_tile):
    """Pick (TM, B_pad): TM is a multiple of 16, <= 1024, and the grid gets >=2
    steps on small batches when that costs no extra padding (v7x dual-TC)."""
    bt = max(16, (min(batch_tile, 1024) // 16) * 16)  # 16-aligned, capped
    b16 = _round_up(B, 16)
    if b16 <= bt:
        if b16 % 32 == 0:
            return b16 // 2, b16  # 2 grid steps -> both TensorCores on v7x
        return b16, b16           # tiny batch: single step, no extra padding
    tm = bt
    return tm, _round_up(B, tm)


def parser_model_forward(word_idx, pos_idx, dep_idx, prep, *, batch_tile=1024):
    """Embedding lookups + concat in XLA glue, fused 3-layer MLP in one Pallas kernel."""
    # TODO(synk): embedding gather + concat stays in XLA glue; fusing it via
    #             scalar-prefetched indices + VMEM-resident tables is possible but
    #             only pays off at real configs (D~1800) and needs profiling of the
    #             in-kernel gather vs. the saved x round trip.
    B = word_idx.shape[0]
    w_e = jnp.take(prep["word_emb"], word_idx, axis=0).reshape(B, -1)
    p_e = jnp.take(prep["pos_emb"], pos_idx, axis=0).reshape(B, -1)
    d_e = jnp.take(prep["dep_emb"], dep_idx, axis=0).reshape(B, -1)
    x = jnp.concatenate([w_e, p_e, d_e], axis=1)  # (B, D) bf16
    D = x.shape[1]

    TM, B_pad = _choose_batch_tile(B, batch_tile)
    if B_pad != B:
        x = jnp.pad(x, ((0, B_pad - B), (0, 0)))

    w1, b1 = prep["w1"], prep["b1"]
    w2, b2 = prep["w2"], prep["b2"]
    w3, b3 = prep["w3"], prep["b3"]
    L1, L2, NCp = w1.shape[1], w2.shape[1], w3.shape[1]

    const = lambda i: (0, 0)  # weights/biases: same block every step -> VMEM resident

    out = pl.pallas_call(
        parser_mlp_kernel,
        out_shape=jax.ShapeDtypeStruct((B_pad, NCp), jnp.bfloat16),
        grid_spec=pltpu.PrefetchScalarGridSpec(
            num_scalar_prefetch=0,
            grid=(B_pad // TM,),
            in_specs=[
                pl.BlockSpec((TM, D), lambda i: (i, 0)),  # stream activation tiles
                pl.BlockSpec((D, L1), const),
                pl.BlockSpec((1, L1), const),
                pl.BlockSpec((L1, L2), const),
                pl.BlockSpec((1, L2), const),
                pl.BlockSpec((L2, NCp), const),
                pl.BlockSpec((1, NCp), const),
            ],
            out_specs=pl.BlockSpec((TM, NCp), lambda i: (i, 0)),
        ),
        compiler_params=pltpu.CompilerParams(
            dimension_semantics=("parallel",),       # shard batch tiles across v7x TCs
            vmem_limit_bytes=48 * 1024 * 1024,       # headroom for big tiles, < v7x 64 MiB
        ),
    )(x, w1, b1, w2, b2, w3, b3)

    return out[:B, : prep["num_classes"]]


def init_params(key, *, vocab_w, vocab_p, vocab_d, n_w, n_p, n_d,
                emb_dim, l1, l2, num_classes):
    ks = jax.random.split(key, 9)
    D = emb_dim * (n_w + n_p + n_d)
    initrange = 0.1
    return {
        "word_emb": jax.random.normal(ks[0], (vocab_w, emb_dim), jnp.float32) * 0.01,
        "pos_emb":  jax.random.normal(ks[1], (vocab_p, emb_dim), jnp.float32) * 0.01,
        "dep_emb":  jax.random.normal(ks[2], (vocab_d, emb_dim), jnp.float32) * 0.01,
        # Linear weights: uniform(-0.1, 0.1), stored (in, out)
        "w1": jax.random.uniform(ks[3], (D, l1), jnp.float32, -initrange, initrange),
        "b1": jax.random.uniform(ks[4], (1, l1), jnp.float32,
                                 -1.0 / jnp.sqrt(D), 1.0 / jnp.sqrt(D)),
        "w2": jax.random.uniform(ks[5], (l1, l2), jnp.float32, -initrange, initrange),
        "b2": jax.random.uniform(ks[6], (1, l2), jnp.float32,
                                 -1.0 / jnp.sqrt(l1), 1.0 / jnp.sqrt(l1)),
        "w3": jax.random.uniform(ks[7], (l2, num_classes), jnp.float32,
                                 -initrange, initrange),
        "b3": jax.random.uniform(ks[8], (1, num_classes), jnp.float32,
                                 -1.0 / jnp.sqrt(l2), 1.0 / jnp.sqrt(l2)),
    }


if __name__ == "__main__":
    # small synthetic config (Chen & Manning uses 18/18/12 features; scaled down)
    B = 8
    n_w, n_p, n_d = 6, 6, 4
    emb_dim = 16                       # D = 16 * 16 = 256
    l1, l2 = 128, 128
    num_classes = 3
    vocab_w, vocab_p, vocab_d = 100, 20, 15

    key = jax.random.PRNGKey(0)
    kp, ki = jax.random.split(key)
    params = init_params(kp, vocab_w=vocab_w, vocab_p=vocab_p, vocab_d=vocab_d,
                         n_w=n_w, n_p=n_p, n_d=n_d, emb_dim=emb_dim,
                         l1=l1, l2=l2, num_classes=num_classes)
    prep = prepare_inference_params(params)  # one-time cast/pad (hoisted out of forward)

    k1, k2, k3 = jax.random.split(ki, 3)
    word_idx = jax.random.randint(k1, (B, n_w), 0, vocab_w)
    pos_idx  = jax.random.randint(k2, (B, n_p), 0, vocab_p)
    dep_idx  = jax.random.randint(k3, (B, n_d), 0, vocab_d)

    out = parser_model_forward(word_idx, pos_idx, dep_idx, prep)
    jax.block_until_ready(out)
    assert out.shape == (B, num_classes)

    # reference with identical bf16-operand / f32-accumulate / bf16-writeback numerics
    w_e = jnp.take(prep["word_emb"], word_idx, axis=0).reshape(B, -1)
    p_e = jnp.take(prep["pos_emb"], pos_idx, axis=0).reshape(B, -1)
    d_e = jnp.take(prep["dep_emb"], dep_idx, axis=0).reshape(B, -1)
    xb = jnp.concatenate([w_e, p_e, d_e], axis=1)                     # bf16
    h1 = jnp.dot(xb, prep["w1"], preferred_element_type=jnp.float32) + prep["b1"]
    h1 = h1 ** 3
    h2 = jnp.dot(h1.astype(jnp.bfloat16), prep["w2"],
                 preferred_element_type=jnp.float32) + prep["b2"]
    h2 = jnp.maximum(h2, 0.0)
    ref = (jnp.dot(h2.astype(jnp.bfloat16), prep["w3"][:, :num_classes],
                   preferred_element_type=jnp.float32)
           + prep["b3"][:, :num_classes])
    ref = ref.astype(jnp.bfloat16).astype(jnp.float32)

    assert jnp.allclose(out.astype(jnp.float32), ref, atol=1e-2, rtol=2e-2), \
        "mismatch vs reference"

    print("KERNEL_OK")
</pallas_src>

<mosaic_0001>
module attributes {stable_mosaic.version = 11 : i64} {
  func.func @parser_mlp_kernel(%arg0: i32, %arg1: memref<16x256xbf16, #tpu.memory_space<vmem>>, %arg2: memref<256x128xbf16, #tpu.memory_space<vmem>>, %arg3: memref<1x128xf32, #tpu.memory_space<vmem>>, %arg4: memref<128x128xbf16, #tpu.memory_space<vmem>>, %arg5: memref<1x128xf32, #tpu.memory_space<vmem>>, %arg6: memref<128x128xbf16, #tpu.memory_space<vmem>>, %arg7: memref<1x128xf32, #tpu.memory_space<vmem>>, %arg8: memref<16x128xbf16, #tpu.memory_space<vmem>>) attributes {dimension_semantics = [#tpu.dimension_semantics<parallel>], iteration_bounds = array<i64: 1>, scalar_prefetch = 0 : i64, scratch_operands = 0 : i64, tpu.core_type = #tpu.core_type<tc>, window_params = [{transform_indices = @transform_0, window_bounds = array<i64: 16, 256>}, {pipeline_mode = #tpu.pipeline_mode<synchronous>, transform_indices = @transform_1, window_bounds = array<i64: 256, 128>}, {pipeline_mode = #tpu.pipeline_mode<synchronous>, transform_indices = @transform_2, window_bounds = array<i64: 1, 128>}, {pipeline_mode = #tpu.pipeline_mode<synchronous>, transform_indices = @transform_3, window_bounds = array<i64: 128, 128>}, {pipeline_mode = #tpu.pipeline_mode<synchronous>, transform_indices = @transform_4, window_bounds = array<i64: 1, 128>}, {pipeline_mode = #tpu.pipeline_mode<synchronous>, transform_indices = @transform_5, window_bounds = array<i64: 128, 128>}, {pipeline_mode = #tpu.pipeline_mode<synchronous>, transform_indices = @transform_6, window_bounds = array<i64: 1, 128>}, {transform_indices = @transform_7, window_bounds = array<i64: 16, 128>}]} {
    %c0 = arith.constant 0 : index
    %c0_0 = arith.constant 0 : index
    %0 = vector.load %arg1[%c0, %c0_0] : memref<16x256xbf16, #tpu.memory_space<vmem>>, vector<16x256xbf16>
    %c0_1 = arith.constant 0 : index
    %c0_2 = arith.constant 0 : index
    %1 = vector.load %arg2[%c0_1, %c0_2] : memref<256x128xbf16, #tpu.memory_space<vmem>>, vector<256x128xbf16>
    %cst = arith.constant dense<0.000000e+00> : vector<16x128xf32>
    %2 = tpu.matmul %0, %1, %cst {dimension_numbers = #tpu.dot_dimension_numbers<[1], [0], [0], [1], [0, 0, 1, 1], [], []>} : vector<16x256xbf16>, vector<256x128xbf16>, vector<16x128xf32> -> vector<16x128xf32>
    %c0_3 = arith.constant 0 : index
    %c0_4 = arith.constant 0 : index
    %3 = vector.load %arg3[%c0_3, %c0_4] : memref<1x128xf32, #tpu.memory_space<vmem>>, vector<1x128xf32>
    %4 = vector.broadcast %3 : vector<1x128xf32> to vector<16x128xf32>
    %5 = arith.addf %2, %4 : vector<16x128xf32>
    %6 = arith.mulf %5, %5 : vector<16x128xf32>
    %7 = arith.mulf %6, %5 : vector<16x128xf32>
    %8 = arith.truncf %7 : vector<16x128xf32> to vector<16x128xbf16>
    %c0_5 = arith.constant 0 : index
    %c0_6 = arith.constant 0 : index
    %9 = vector.load %arg4[%c0_5, %c0_6] : memref<128x128xbf16, #tpu.memory_space<vmem>>, vector<128x128xbf16>
    %cst_7 = arith.constant dense<0.000000e+00> : vector<16x128xf32>
    %10 = tpu.matmul %8, %9, %cst_7 {dimension_numbers = #tpu.dot_dimension_numbers<[1], [0], [0], [1], [0, 0, 1, 1], [], []>} : vector<16x128xbf16>, vector<128x128xbf16>, vector<16x128xf32> -> vector<16x128xf32>
    %c0_8 = arith.constant 0 : index
    %c0_9 = arith.constant 0 : index
    %11 = vector.load %arg5[%c0_8, %c0_9] : memref<1x128xf32, #tpu.memory_space<vmem>>, vector<1x128xf32>
    %12 = vector.broadcast %11 : vector<1x128xf32> to vector<16x128xf32>
    %13 = arith.addf %10, %12 : vector<16x128xf32>
    %cst_10 = arith.constant 0.000000e+00 : f32
    %14 = vector.broadcast %cst_10 : f32 to vector<16x128xf32>
    %15 = arith.maximumf %13, %14 : vector<16x128xf32>
    %16 = arith.truncf %15 : vector<16x128xf32> to vector<16x128xbf16>
    %c0_11 = arith.constant 0 : index
    %c0_12 = arith.constant 0 : index
    %17 = vector.load %arg6[%c0_11, %c0_12] : memref<128x128xbf16, #tpu.memory_space<vmem>>, vector<128x128xbf16>
    %cst_13 = arith.constant dense<0.000000e+00> : vector<16x128xf32>
    %18 = tpu.matmul %16, %17, %cst_13 {dimension_numbers = #tpu.dot_dimension_numbers<[1], [0], [0], [1], [0, 0, 1, 1], [], []>} : vector<16x128xbf16>, vector<128x128xbf16>, vector<16x128xf32> -> vector<16x128xf32>
    %c0_14 = arith.constant 0 : index
    %c0_15 = arith.constant 0 : index
    %19 = vector.load %arg7[%c0_14, %c0_15] : memref<1x128xf32, #tpu.memory_space<vmem>>, vector<1x128xf32>
    %20 = vector.broadcast %19 : vector<1x128xf32> to vector<16x128xf32>
    %21 = arith.addf %18, %20 : vector<16x128xf32>
    %22 = arith.truncf %21 : vector<16x128xf32> to vector<16x128xbf16>
    %c0_16 = arith.constant 0 : index
    %c0_17 = arith.constant 0 : index
    %23 = vector.load %arg8[%c0_16, %c0_17] : memref<16x128xbf16, #tpu.memory_space<vmem>>, vector<16x128xbf16>
    tpu.vector_store %arg8[%c0_16, %c0_17], %22 {strides = array<i32>} : memref<16x128xbf16, #tpu.memory_space<vmem>>, vector<16x128xbf16>,
    return
  }
  func.func @transform_0(%arg0: i32) -> (i32, i32) {
    %c0_i32 = arith.constant 0 : i32
    %c0_i32_0 = arith.constant 0 : i32
    return %arg0, %c0_i32 : i32, i32
  }
  func.func @transform_1(%arg0: i32) -> (i32, i32) {
    %c0_i32 = arith.constant 0 : i32
    %c0_i32_0 = arith.constant 0 : i32
    %c0_i32_1 = arith.constant 0 : i32
    return %c0_i32, %c0_i32_0 : i32, i32
  }
  func.func @transform_2(%arg0: i32) -> (i32, i32) {
    %c0_i32 = arith.constant 0 : i32
    %c0_i32_0 = arith.constant 0 : i32
    %c0_i32_1 = arith.constant 0 : i32
    return %c0_i32, %c0_i32_0 : i32, i32
  }
  func.func @transform_3(%arg0: i32) -> (i32, i32) {
    %c0_i32 = arith.constant 0 : i32
    %c0_i32_0 = arith.constant 0 : i32
    %c0_i32_1 = arith.constant 0 : i32
    return %c0_i32, %c0_i32_0 : i32, i32
  }
  func.func @transform_4(%arg0: i32) -> (i32, i32) {
    %c0_i32 = arith.constant 0 : i32
    %c0_i32_0 = arith.constant 0 : i32
    %c0_i32_1 = arith.constant 0 : i32
    return %c0_i32, %c0_i32_0 : i32, i32
  }
  func.func @transform_5(%arg0: i32) -> (i32, i32) {
    %c0_i32 = arith.constant 0 : i32
    %c0_i32_0 = arith.constant 0 : i32
    %c0_i32_1 = arith.constant 0 : i32
    return %c0_i32, %c0_i32_0 : i32, i32
  }
  func.func @transform_6(%arg0: i32) -> (i32, i32) {
    %c0_i32 = arith.constant 0 : i32
    %c0_i32_0 = arith.constant 0 : i32
    %c0_i32_1 = arith.constant 0 : i32
    return %c0_i32, %c0_i32_0 : i32, i32
  }
  func.func @transform_7(%arg0: i32) -> (i32, i32) {
    %c0_i32 = arith.constant 0 : i32
    %c0_i32_0 = arith.constant 0 : i32
    return %arg0, %c0_i32 : i32, i32
  }
}

</mosaic_0001>

<llo_original>
// kernel: tpu_custom_call.1
$region0: #{tpu_custom_call.1}
  #allocation0 [shape = 'u32[]', space=smem, size = 0x4, offset = 0x4, fixed_abs, tag = 'smem constant byte address 0x4 - core index']
  #allocation1 [shape = 'u32[144,128]{1,0:T(1,128)}', space=vmem, size = 0x12000, scoped, tag = 'internal scratch']
  %s0 = inlined_call_operand.hbm [shape: bf16[16,256], index: 0, kind: input, shape index: {}]
  %s1 = inlined_call_operand.hbm [shape: bf16[256,128], index: 1, kind: input, shape index: {}]
  %s2 = inlined_call_operand.vmem [shape: f32[1,128], index: 2, kind: input, shape index: {}]
  %s3 = inlined_call_operand.hbm [shape: bf16[128,128], index: 3, kind: input, shape index: {}]
  %s4 = inlined_call_operand.vmem [shape: f32[1,128], index: 4, kind: input, shape index: {}]
  %s5 = inlined_call_operand.hbm [shape: bf16[128,128], index: 5, kind: input, shape index: {}]
  %s6 = inlined_call_operand.vmem [shape: f32[1,128], index: 6, kind: input, shape index: {}]
  %s7 = inlined_call_operand.hbm [shape: bf16[16,128], index: 7, kind: output, shape index: {}]
  %s8 = sld [smem:[#allocation0]]
  $region54: #{tpu_custom_call.1} parent=0
    _
  %s10 = ssub.s32 1, %s8
  %s11 = scalar_select 0, %s10, %s8
  $region1: #{tpu_custom_call.1} parent=0
    #allocation2 [shape = 'u8[8192]{0}', space=vmem, size = 0x2000, scoped, tag = 'input window, operand 0, single buffered']
    #allocation3 [shape = 's32[1]{0}', space=sflag, size = 0x4, scoped, tag = 'scoped memory for tpu_custom_call.1']
    #allocation4 [shape = 's32[1]{0}', space=sflag, size = 0x4, scoped, tag = 'scoped memory for tpu_custom_call.1']
    #allocation5 [shape = 'u8[65536]{0}', space=vmem, size = 0x10000, scoped, tag = 'input window, operand 1, single buffered']
    #allocation6 [shape = 's32[1]{0}', space=sflag, size = 0x4, scoped, tag = 'scoped memory for tpu_custom_call.1']
    #allocation7 [shape = 'u8[32768]{0}', space=vmem, size = 0x8000, scoped, tag = 'input window, operand 3, single buffered']
    #allocation8 [shape = 'u8[32768]{0}', space=vmem, size = 0x8000, scoped, tag = 'input window, operand 5, single buffered']
    #allocation9 [shape = 's32[1]{0}', space=sflag, size = 0x4, scoped, tag = 'scoped memory for tpu_custom_call.1']
    #allocation10 [shape = 'u8[4096]{0}', space=vmem, size = 0x1000, scoped, tag = 'output window, operand 0, single buffered']
    %12 = vsyncpa [#allocation3], 0
    %13 = vsyncpa [#allocation6], 0
    %14 = vsyncpa [#allocation9], 0
    %15 = vsyncpa [#allocation4], 0
    // Predicated region
    $region2: #{tpu_custom_call.1} parent=1 // pred_check
      _
    $region3: #{tpu_custom_call.1} parent=1 // pred_check_branch
      %17 = sbr.rel (0) target = $region5
    $region4: #{tpu_custom_call.1} parent=1 // pred_region
      %s19 = ssub.s32 256, 256
      %20 = vsyncadd [#allocation3], %s19
      %s21 = sshll.u32 [#allocation2], 4
      %s22 = int_to_ptr.vmem [resolvable:$true] %s21
      %27 = dma.hbm_to_vmem [thread:$0]  %s0, 256, %s22, [#allocation3], 128, 128, 8
    $region5: #{tpu_custom_call.1} parent=1 // pred_fallthru
      _
    // Predicated region
    $region6: #{tpu_custom_call.1} parent=1 // pred_check
      _
    $region7: #{tpu_custom_call.1} parent=1 // pred_check_branch
      %29 = sbr.rel (0) target = $region9
    $region8: #{tpu_custom_call.1} parent=1 // pred_region
      %s31 = ssub.s32 2048, 2048
      %32 = vsyncadd [#allocation6], %s31
      %s33 = sshll.u32 [#allocation5], 4
      %s34 = int_to_ptr.vmem [resolvable:$true] %s33
      %39 = dma.hbm_to_vmem [thread:$0]  %s1, 2048, %s34, [#allocation6], 64, 64, 4
    $region9: #{tpu_custom_call.1} parent=1 // pred_fallthru
      _
    // Predicated region
    $region10: #{tpu_custom_call.1} parent=1 // pred_check
      _
    $region11: #{tpu_custom_call.1} parent=1 // pred_check_branch
      %41 = sbr.rel (0) target = $region13
    $region12: #{tpu_custom_call.1} parent=1 // pred_region
      _
    $region13: #{tpu_custom_call.1} parent=1 // pred_fallthru
      _
    // Predicated region
    $region14: #{tpu_custom_call.1} parent=1 // pred_check
      _
    $region15: #{tpu_custom_call.1} parent=1 // pred_check_branch
      %43 = sbr.rel (0) target = $region17
    $region16: #{tpu_custom_call.1} parent=1 // pred_region
      %s45 = ssub.s32 1024, 1024
      %46 = vsyncadd [#allocation6], %s45
      %s47 = sshll.u32 [#allocation7], 4
      %s48 = int_to_ptr.vmem [resolvable:$true] %s47
      %53 = dma.hbm_to_vmem [thread:$0]  %s3, 1024, %s48, [#allocation6], 64, 64, 4
    $region17: #{tpu_custom_call.1} parent=1 // pred_fallthru
      _
    // Predicated region
    $region18: #{tpu_custom_call.1} parent=1 // pred_check
      _
    $region19: #{tpu_custom_call.1} parent=1 // pred_check_branch
      %55 = sbr.rel (0) target = $region21
    $region20: #{tpu_custom_call.1} parent=1 // pred_region
      _
    $region21: #{tpu_custom_call.1} parent=1 // pred_fallthru
      _
    // Predicated region
    $region22: #{tpu_custom_call.1} parent=1 // pred_check
      _
    $region23: #{tpu_custom_call.1} parent=1 // pred_check_branch
      %57 = sbr.rel (0) target = $region25
    $region24: #{tpu_custom_call.1} parent=1 // pred_region
      %s59 = ssub.s32 1024, 1024
      %60 = vsyncadd [#allocation9], %s59
      %s61 = sshll.u32 [#allocation8], 4
      %s62 = int_to_ptr.vmem [resolvable:$true] %s61
      %67 = dma.hbm_to_vmem [thread:$0]  %s5, 1024, %s62, [#allocation9], 64, 64, 4
    $region25: #{tpu_custom_call.1} parent=1 // pred_fallthru
      _
    // Predicated region
    $region26: #{tpu_custom_call.1} parent=1 // pred_check
      _
    $region27: #{tpu_custom_call.1} parent=1 // pred_check_branch
      %69 = sbr.rel (0) target = $region29
    $region28: #{tpu_custom_call.1} parent=1 // pred_region
      _
    $region29: #{tpu_custom_call.1} parent=1 // pred_fallthru
      _
    // Predicated region
    $region30: #{tpu_custom_call.1} parent=1 // pred_check
      _
    $region31: #{tpu_custom_call.1} parent=1 // pred_check_branch
      %71 = sbr.rel (0) target = $region33
    $region32: #{tpu_custom_call.1} parent=1 // pred_region
      %72 = dma.done [#allocation3], 256
    $region33: #{tpu_custom_call.1} parent=1 // pred_fallthru
      _
    // Predicated region
    $region34: #{tpu_custom_call.1} parent=1 // pred_check
      _
    $region35: #{tpu_custom_call.1} parent=1 // pred_check_branch
      %74 = sbr.rel (0) target = $region37
    $region36: #{tpu_custom_call.1} parent=1 // pred_region
      %75 = dma.done [#allocation6], 2048
    $region37: #{tpu_custom_call.1} parent=1 // pred_fallthru
      _
    // Predicated region
    $region38: #{tpu_custom_call.1} parent=1 // pred_check
      _
    $region39: #{tpu_custom_call.1} parent=1 // pred_check_branch
      %77 = sbr.rel (0) target = $region41
    $region40: #{tpu_custom_call.1} parent=1 // pred_region
      %78 = dma.done [#allocation6], 1024
    $region41: #{tpu_custom_call.1} parent=1 // pred_fallthru
      _
    // Predicated region
    $region42: #{tpu_custom_call.1} parent=1 // pred_check
      _
    $region43: #{tpu_custom_call.1} parent=1 // pred_check_branch
      %80 = sbr.rel (0) target = $region45
    $region44: #{tpu_custom_call.1} parent=1 // pred_region
      %81 = dma.done [#allocation9], 1024
    $region45: #{tpu_custom_call.1} parent=1 // pred_fallthru
      _
    %v83 = vld [vmem:[#allocation2] sm:$0xff]
    %v84 = vld [vmem:[#allocation2 + $0x8] sm:$0xff]
    %v85 = vld [vmem:[#allocation5] sm:$0xf]
    %v86 = vld [vmem:[#allocation5 + $0x4] sm:$0xf]
    %v87 = vld [vmem:[#allocation5 + $0x8] sm:$0xf]
    %v88 = vld [vmem:[#allocation5 + $0xc] sm:$0xf]
    %v89 = vld [vmem:[#allocation5 + $0x10] sm:$0xf]
    %v90 = vld [vmem:[#allocation5 + $0x14] sm:$0xf]
    %v91 = vld [vmem:[#allocation5 + $0x18] sm:$0xf]
    %v92 = vld [vmem:[#allocation5 + $0x1c] sm:$0xf]
    %v93 = vld [vmem:[#allocation5 + $0x20] sm:$0xf]
    %v94 = vld [vmem:[#allocation5 + $0x24] sm:$0xf]
    %v95 = vld [vmem:[#allocation5 + $0x28] sm:$0xf]
    %v96 = vld [vmem:[#allocation5 + $0x2c] sm:$0xf]
    %v97 = vld [vmem:[#allocation5 + $0x30] sm:$0xf]
    %v98 = vld [vmem:[#allocation5 + $0x34] sm:$0xf]
    %v99 = vld [vmem:[#allocation5 + $0x38] sm:$0xf]
    %v100 = vld [vmem:[#allocation5 + $0x3c] sm:$0xf]
    %v101 = vld [vmem:[#allocation5 + $0x40] sm:$0xf]
    %v102 = vld [vmem:[#allocation5 + $0x44] sm:$0xf]
    %v103 = vld [vmem:[#allocation5 + $0x48] sm:$0xf]
    %v104 = vld [vmem:[#allocation5 + $0x4c] sm:$0xf]
    %v105 = vld [vmem:[#allocation5 + $0x50] sm:$0xf]
    %v106 = vld [vmem:[#allocation5 + $0x54] sm:$0xf]
    %v107 = vld [vmem:[#allocation5 + $0x58] sm:$0xf]
    %v108 = vld [vmem:[#allocation5 + $0x5c] sm:$0xf]
    %v109 = vld [vmem:[#allocation5 + $0x60] sm:$0xf]
    %v110 = vld [vmem:[#allocation5 + $0x64] sm:$0xf]
    %v111 = vld [vmem:[#allocation5 + $0x68] sm:$0xf]
    %v112 = vld [vmem:[#allocation5 + $0x6c] sm:$0xf]
    %v113 = vld [vmem:[#allocation5 + $0x70] sm:$0xf]
    %v114 = vld [vmem:[#allocation5 + $0x74] sm:$0xf]
    %v115 = vld [vmem:[#allocation5 + $0x78] sm:$0xf]
    %v116 = vld [vmem:[#allocation5 + $0x7c] sm:$0xf]
    %v117 = vld [vmem:[%s2] sm:$0x1]
    %v119 = vlaneseq
    %v120 = vshrl.u32 %v119, 7
    %v121 = vsub.s32 0, %v120
    %v122 = vrot.slane %v117, %v121
    %v126 = vunpack.c.l.b16 %v83
    %v127 = vunpack.c.h.b16 %v83
    %v128 = vunpack.c.l.b16 %v84
    %v129 = vunpack.c.h.b16 %v84
    %v130 = vpack.c.b16 %v128, %v126
    %v131 = vpack.c.b16 %v129, %v127
    %v166 = vunpack.c.l.b16 %v85
    %v167 = vunpack.c.l.b16 %v86
    %v168 = vunpack.c.l.b16 %v87
    %v169 = vunpack.c.l.b16 %v88
    %v170 = vunpack.c.l.b16 %v89
    %v171 = vunpack.c.l.b16 %v90
    %v172 = vunpack.c.l.b16 %v91
    %v173 = vunpack.c.l.b16 %v92
    %v174 = vunpack.c.l.b16 %v93
    %v175 = vunpack.c.l.b16 %v94
    %v176 = vunpack.c.l.b16 %v95
    %v177 = vunpack.c.l.b16 %v96
    %v178 = vunpack.c.l.b16 %v97
    %v179 = vunpack.c.l.b16 %v98
    %v180 = vunpack.c.l.b16 %v99
    %v181 = vunpack.c.l.b16 %v100
    %v182 = vunpack.c.l.b16 %v101
    %v183 = vunpack.c.l.b16 %v102
    %v184 = vunpack.c.l.b16 %v103
    %v185 = vunpack.c.l.b16 %v104
    %v186 = vunpack.c.l.b16 %v105
    %v187 = vunpack.c.l.b16 %v106
    %v188 = vunpack.c.l.b16 %v107
    %v189 = vunpack.c.l.b16 %v108
    %v190 = vunpack.c.l.b16 %v109
    %v191 = vunpack.c.l.b16 %v110
    %v192 = vunpack.c.l.b16 %v111
    %v193 = vunpack.c.l.b16 %v112
    %v194 = vunpack.c.l.b16 %v113
    %v195 = vunpack.c.l.b16 %v114
    %v196 = vunpack.c.l.b16 %v115
    %v197 = vunpack.c.l.b16 %v116
    %v198 = vpack.c.b16 %v167, %v166
    %v199 = vpack.c.b16 %v169, %v168
    %v200 = vpack.c.b16 %v171, %v170
    %v201 = vpack.c.b16 %v173, %v172
    %v202 = vpack.c.b16 %v175, %v174
    %v203 = vpack.c.b16 %v177, %v176
    %v204 = vpack.c.b16 %v179, %v178
    %v205 = vpack.c.b16 %v181, %v180
    %v206 = vpack.c.b16 %v183, %v182
    %v207 = vpack.c.b16 %v185, %v184
    %v208 = vpack.c.b16 %v187, %v186
    %v209 = vpack.c.b16 %v189, %v188
    %v210 = vpack.c.b16 %v191, %v190
    %v211 = vpack.c.b16 %v193, %v192
    %v212 = vpack.c.b16 %v195, %v194
    %v213 = vpack.c.b16 %v197, %v196
    %230 = vmatprep.subr.bf16.mxu0 0
    %231 = vmatpush1.bf16.msra.mxu0 %v205
    %232 = vmatprep.subr.bf16.mxu0 0
    %233 = vmatpush1.bf16.msra.mxu0 %v204
    %234 = vmatprep.subr.bf16.mxu0 0
    %235 = vmatpush1.bf16.msra.mxu0 %v203
    %236 = vmatprep.subr.bf16.mxu0 0
    %237 = vmatpush1.bf16.msra.mxu0 %v202
    %238 = vmatprep.subr.bf16.mxu0 0
    %239 = vmatpush1.bf16.msra.mxu0 %v201
    %240 = vmatprep.subr.bf16.mxu0 0
    %241 = vmatpush1.bf16.msra.mxu0 %v200
    %242 = vmatprep.subr.bf16.mxu0 0
    %243 = vmatpush1.bf16.msra.mxu0 %v199
    %244 = vmatprep.subr.bf16.mxu0 0
    %245 = vmatpush1.bf16.msra.mxu0 %v198
    %246 = vmatprep.subr.bf16.mxu0 0
    %247 = vmatpush2.bf16.msra.mxu0 %v213
    %248 = vmatprep.subr.bf16.mxu0 0
    %249 = vmatpush2.bf16.msra.mxu0 %v212
    %250 = vmatprep.subr.bf16.mxu0 0
    %251 = vmatpush2.bf16.msra.mxu0 %v211
    %252 = vmatprep.subr.bf16.mxu0 0
    %253 = vmatpush2.bf16.msra.mxu0 %v210
    %254 = vmatprep.subr.bf16.mxu0 0
    %255 = vmatpush2.bf16.msra.mxu0 %v209
    %256 = vmatprep.subr.bf16.mxu0 0
    %257 = vmatpush2.bf16.msra.mxu0 %v208
    %258 = vmatprep.subr.bf16.mxu0 0
    %259 = vmatpush2.bf16.msra.mxu0 %v207
    %260 = vmatprep.subr.bf16.mxu0 0
    %261 = vmatpush2.bf16.msra.mxu0 %v206
    %262 = vmatprep.mubr.bf16.mxu0 %v131
    %263 = vmatmul.mubr.bf16.gmra.mxu0 %v130
    %v264 = vpop.f32.mrf.mxu0
    %v265 = vadd.f32 %v122, %v264
    %v266 = vpop.f32.mrf.mxu0
    %v267 = vpop.f32.mrf.mxu0
    %v268 = vadd.f32 %v122, %v267
    %v269 = vpop.f32.mrf.mxu0
    %270 = vdwg.mxu0
    %v271 = vmul.f32 %v265, %v265
    %v272 = vmul.f32 %v268, %v268
    %v273 = vmul.f32 %v271, %v265
    %v274 = vmul.f32 %v272, %v268
    %v275 = vpack.c.bf16 %v274, %v273
    %v276 = vld [vmem:[#allocation7] sm:$0xf]
    %v277 = vld [vmem:[#allocation7 + $0x4] sm:$0xf]
    %v278 = vld [vmem:[#allocation7 + $0x8] sm:$0xf]
    %v279 = vld [vmem:[#allocation7 + $0xc] sm:$0xf]
    %v280 = vld [vmem:[#allocation7 + $0x10] sm:$0xf]
    %v281 = vld [vmem:[#allocation7 + $0x14] sm:$0xf]
    %v282 = vld [vmem:[#allocation7 + $0x18] sm:$0xf]
    %v283 = vld [vmem:[#allocation7 + $0x1c] sm:$0xf]
    %v284 = vld [vmem:[#allocation7 + $0x20] sm:$0xf]
    %v285 = vld [vmem:[#allocation7 + $0x24] sm:$0xf]
    %v286 = vld [vmem:[#allocation7 + $0x28] sm:$0xf]
    %v287 = vld [vmem:[#allocation7 + $0x2c] sm:$0xf]
    %v288 = vld [vmem:[#allocation7 + $0x30] sm:$0xf]
    %v289 = vld [vmem:[#allocation7 + $0x34] sm:$0xf]
    %v290 = vld [vmem:[#allocation7 + $0x38] sm:$0xf]
    %v291 = vld [vmem:[#allocation7 + $0x3c] sm:$0xf]
    %v292 = vld [vmem:[%s4] sm:$0x1]
    %v294 = vlaneseq
    %v295 = vshrl.u32 %v294, 7
    %v296 = vsub.s32 0, %v295
    %v297 = vrot.slane %v292, %v296
    %v315 = vunpack.c.l.b16 %v276
    %v316 = vunpack.c.l.b16 %v277
    %v317 = vunpack.c.l.b16 %v278
    %v318 = vunpack.c.l.b16 %v279
    %v319 = vunpack.c.l.b16 %v280
    %v320 = vunpack.c.l.b16 %v281
    %v321 = vunpack.c.l.b16 %v282
    %v322 = vunpack.c.l.b16 %v283
    %v323 = vunpack.c.l.b16 %v284
    %v324 = vunpack.c.l.b16 %v285
    %v325 = vunpack.c.l.b16 %v286
    %v326 = vunpack.c.l.b16 %v287
    %v327 = vunpack.c.l.b16 %v288
    %v328 = vunpack.c.l.b16 %v289
    %v329 = vunpack.c.l.b16 %v290
    %v330 = vunpack.c.l.b16 %v291
    %v331 = vpack.c.b16 %v316, %v315
    %v332 = vpack.c.b16 %v318, %v317
    %v333 = vpack.c.b16 %v320, %v319
    %v334 = vpack.c.b16 %v322, %v321
    %v335 = vpack.c.b16 %v324, %v323
    %v336 = vpack.c.b16 %v326, %v325
    %v337 = vpack.c.b16 %v328, %v327
    %v338 = vpack.c.b16 %v330, %v329
    %347 = vmatprep.subr.bf16.mxu0 0
    %348 = vmatpush1.bf16.msra.mxu0 %v338
    %349 = vmatprep.subr.bf16.mxu0 0
    %350 = vmatpush1.bf16.msra.mxu0 %v337
    %351 = vmatprep.subr.bf16.mxu0 0
    %352 = vmatpush1.bf16.msra.mxu0 %v336
    %353 = vmatprep.subr.bf16.mxu0 0
    %354 = vmatpush1.bf16.msra.mxu0 %v335
    %355 = vmatprep.subr.bf16.mxu0 0
    %356 = vmatpush1.bf16.msra.mxu0 %v334
    %357 = vmatprep.subr.bf16.mxu0 0
    %358 = vmatpush1.bf16.msra.mxu0 %v333
    %359 = vmatprep.subr.bf16.mxu0 0
    %360 = vmatpush1.bf16.msra.mxu0 %v332
    %361 = vmatprep.subr.bf16.mxu0 0
    %362 = vmatpush1.bf16.msra.mxu0 %v331
    %363 = vmatprep.subr.bf16.mxu0 0
    %364 = vmatpush2.bf16.msra.mxu0 0
    %365 = vmatprep.subr.bf16.mxu0 0
    %366 = vmatpush2.bf16.msra.mxu0 0
    %367 = vmatprep.subr.bf16.mxu0 0
    %368 = vmatpush2.bf16.msra.mxu0 0
    %369 = vmatprep.subr.bf16.mxu0 0
    %370 = vmatpush2.bf16.msra.mxu0 0
    %371 = vmatprep.subr.bf16.mxu0 0
    %372 = vmatpush2.bf16.msra.mxu0 0
    %373 = vmatprep.subr.bf16.mxu0 0
    %374 = vmatpush2.bf16.msra.mxu0 0
    %375 = vmatprep.subr.bf16.mxu0 0
    %376 = vmatpush2.bf16.msra.mxu0 0
    %377 = vmatprep.subr.bf16.mxu0 0
    %378 = vmatpush2.bf16.msra.mxu0 0
    %379 = vmatprep.mubr.bf16.mxu0 0
    %380 = vmatmul.mubr.bf16.gmra.mxu0 %v275
    %v381 = vpop.f32.mrf.mxu0
    %v382 = vadd.f32 %v297, %v381
    %v383 = vpop.f32.mrf.mxu0
    %v384 = vpop.f32.mrf.mxu0
    %v385 = vadd.f32 %v297, %v384
    %v386 = vpop.f32.mrf.mxu0
    %387 = vdwg.mxu0
    %v388 = vmax.f32 %v382, 0.0
    %v389 = vmax.f32 %v385, 0.0
    %v390 = vpack.c.bf16 %v389, %v388
    %v391 = vld [vmem:[#allocation8] sm:$0xf]
    %v392 = vld [vmem:[#allocation8 + $0x4] sm:$0xf]
    %v393 = vld [vmem:[#allocation8 + $0x8] sm:$0xf]
    %v394 = vld [vmem:[#allocation8 + $0xc] sm:$0xf]
    %v395 = vld [vmem:[#allocation8 + $0x10] sm:$0xf]
    %v396 = vld [vmem:[#allocation8 + $0x14] sm:$0xf]
    %v397 = vld [vmem:[#allocation8 + $0x18] sm:$0xf]
    %v398 = vld [vmem:[#allocation8 + $0x1c] sm:$0xf]
    %v399 = vld [vmem:[#allocation8 + $0x20] sm:$0xf]
    %v400 = vld [vmem:[#allocation8 + $0x24] sm:$0xf]
    %v401 = vld [vmem:[#allocation8 + $0x28] sm:$0xf]
    %v402 = vld [vmem:[#allocation8 + $0x2c] sm:$0xf]
    %v403 = vld [vmem:[#allocation8 + $0x30] sm:$0xf]
    %v404 = vld [vmem:[#allocation8 + $0x34] sm:$0xf]
    %v405 = vld [vmem:[#allocation8 + $0x38] sm:$0xf]
    %v406 = vld [vmem:[#allocation8 + $0x3c] sm:$0xf]
    %v407 = vld [vmem:[%s6] sm:$0x1]
    %v409 = vlaneseq
    %v410 = vshrl.u32 %v409, 7
    %v411 = vsub.s32 0, %v410
    %v412 = vrot.slane %v407, %v411
    %v430 = vunpack.c.l.b16 %v391
    %v431 = vunpack.c.l.b16 %v392
    %v432 = vunpack.c.l.b16 %v393
    %v433 = vunpack.c.l.b16 %v394
    %v434 = vunpack.c.l.b16 %v395
    %v435 = vunpack.c.l.b16 %v396
    %v436 = vunpack.c.l.b16 %v397
    %v437 = vunpack.c.l.b16 %v398
    %v438 = vunpack.c.l.b16 %v399
    %v439 = vunpack.c.l.b16 %v400
    %v440 = vunpack.c.l.b16 %v401
    %v441 = vunpack.c.l.b16 %v402
    %v442 = vunpack.c.l.b16 %v403
    %v443 = vunpack.c.l.b16 %v404
    %v444 = vunpack.c.l.b16 %v405
    %v445 = vunpack.c.l.b16 %v406
    %v446 = vpack.c.b16 %v431, %v430
    %v447 = vpack.c.b16 %v433, %v432
    %v448 = vpack.c.b16 %v435, %v434
    %v449 = vpack.c.b16 %v437, %v436
    %v450 = vpack.c.b16 %v439, %v438
    %v451 = vpack.c.b16 %v441, %v440
    %v452 = vpack.c.b16 %v443, %v442
    %v453 = vpack.c.b16 %v445, %v444
    %462 = vmatprep.subr.bf16.mxu0 0
    %463 = vmatpush1.bf16.msra.mxu0 %v453
    %464 = vmatprep.subr.bf16.mxu0 0
    %465 = vmatpush1.bf16.msra.mxu0 %v452
    %466 = vmatprep.subr.bf16.mxu0 0
    %467 = vmatpush1.bf16.msra.mxu0 %v451
    %468 = vmatprep.subr.bf16.mxu0 0
    %469 = vmatpush1.bf16.msra.mxu0 %v450
    %470 = vmatprep.subr.bf16.mxu0 0
    %471 = vmatpush1.bf16.msra.mxu0 %v449
    %472 = vmatprep.subr.bf16.mxu0 0
    %473 = vmatpush1.bf16.msra.mxu0 %v448
    %474 = vmatprep.subr.bf16.mxu0 0
    %475 = vmatpush1.bf16.msra.mxu0 %v447
    %476 = vmatprep.subr.bf16.mxu0 0
    %477 = vmatpush1.bf16.msra.mxu0 %v446
    %478 = vmatprep.subr.bf16.mxu0 0
    %479 = vmatpush2.bf16.msra.mxu0 0
    %480 = vmatprep.subr.bf16.mxu0 0
    %481 = vmatpush2.bf16.msra.mxu0 0
    %482 = vmatprep.subr.bf16.mxu0 0
    %483 = vmatpush2.bf16.msra.mxu0 0
    %484 = vmatprep.subr.bf16.mxu0 0
    %485 = vmatpush2.bf16.msra.mxu0 0
    %486 = vmatprep.subr.bf16.mxu0 0
    %487 = vmatpush2.bf16.msra.mxu0 0
    %488 = vmatprep.subr.bf16.mxu0 0
    %489 = vmatpush2.bf16.msra.mxu0 0
    %490 = vmatprep.subr.bf16.mxu0 0
    %491 = vmatpush2.bf16.msra.mxu0 0
    %492 = vmatprep.subr.bf16.mxu0 0
    %493 = vmatpush2.bf16.msra.mxu0 0
    %494 = vmatprep.mubr.bf16.mxu0 0
    %495 = vmatmul.mubr.bf16.gmra.mxu0 %v390
    %v496 = vpop.f32.mrf.mxu0
    %v497 = vadd.f32 %v412, %v496
    %v498 = vpop.f32.mrf.mxu0
    %v499 = vpop.f32.mrf.mxu0
    %v500 = vadd.f32 %v412, %v499
    %v501 = vpop.f32.mrf.mxu0
    %502 = vdwg.mxu0
    %v503 = vpack.c.bf16 %v500, %v497
    %v505 = vunpack.c.l.b16 %v503
    %v506 = vunpack.c.h.b16 %v503
    %v507 = vpack.c.b16 %v505, %v505
    %v508 = vpack.c.b16 %v506, %v506
    %511 = vst [vmem:[#allocation10] sm:$0xf] %v507
    %512 = vst [vmem:[#allocation10 + $0x4] sm:$0xf] %v508
    // Predicated region
    $region46: #{tpu_custom_call.1} parent=1 // pred_check
      _
    $region47: #{tpu_custom_call.1} parent=1 // pred_check_branch
      %514 = sbr.rel (0) target = $region49
    $region48: #{tpu_custom_call.1} parent=1 // pred_region
      %s516 = ssub.s32 128, 128
      %517 = vsyncadd [#allocation4], %s516
      %s518 = sshll.u32 [#allocation10], 4
      %s519 = int_to_ptr.vmem [resolvable:$true] %s518
      %524 = dma.vmem_to_hbm [thread:$0]  %s519, 128, %s7, [#allocation4], 64, 64, 4
    $region49: #{tpu_custom_call.1} parent=1 // pred_fallthru
      _
    // Predicated region
    $region50: #{tpu_custom_call.1} parent=1 // pred_check
      _
    $region51: #{tpu_custom_call.1} parent=1 // pred_check_branch
      %526 = sbr.rel (0) target = $region53
    $region52: #{tpu_custom_call.1} parent=1 // pred_region
      %527 = dma.done [#allocation4], 128
    $region53: #{tpu_custom_call.1} parent=1 // pred_fallthru
      _
    %528 = vsyncpa [#allocation3], 1
    %529 = vsyncpa [#allocation6], 1
    %530 = vsyncpa [#allocation9], 1
    %531 = vsyncpa [#allocation4], 1

</llo_original>
